<compile_context>
chip_gen: v7x
topology: tpu7x:2x2x1
jax: 0.10.0
libtpu: 0.0.40
codegen_flags: <defaults>
</compile_context>

<pallas_src>
import functools
import math

import jax
import jax.numpy as jnp
from jax.experimental import pallas as pl
from jax.experimental.pallas import tpu as pltpu

_PAD_LEFT = 8  # aligned sublane offset of the conv interior inside the halo scratch


# ---------------------------------------------------------------------------
# Kernel 1: Timesteps sinusoid + TimestepEmbedding MLP + the four resnet
# time_emb_proj projections (SiLU folded), all in one call.
# ---------------------------------------------------------------------------
def _time_embed_kernel(t_ref, freq_ref, w1_ref, b1_ref, w2_ref, b2_ref,
                       tw_ref, tb_ref, o_ref):
    arg = t_ref[...] * freq_ref[...]                                   # [B, half]
    # flip_sin_to_cos=True  ->  concat([cos, sin])
    temb = jnp.concatenate([jnp.cos(arg), jnp.sin(arg)], axis=-1)      # [B, 2*half]
    h = jnp.dot(temb, w1_ref[...], preferred_element_type=jnp.float32) + b1_ref[...]
    h = h * jax.nn.sigmoid(h)                                          # SiLU
    e = jnp.dot(h, w2_ref[...], preferred_element_type=jnp.float32) + b2_ref[...]
    e = e * jax.nn.sigmoid(e)                                          # SiLU before time_emb_proj
    o_ref[...] = jnp.dot(e, tw_ref[...],
                         preferred_element_type=jnp.float32) + tb_ref[...]


def time_embed(timesteps, p):
    B = timesteps.shape[0]
    n_out = p["time_proj_b"].shape[-1]            # n_res * C
    C = p["conv_in_b"].shape[-1]
    out = pl.pallas_call(
        _time_embed_kernel,
        out_shape=jax.ShapeDtypeStruct((B, n_out), jnp.float32),
    )(timesteps.reshape(B, 1).astype(jnp.float32), p["time_freqs"],
      p["time_w1"], p["time_b1"], p["time_w2"], p["time_b2"],
      p["time_proj_w"], p["time_proj_b"])
    return out.reshape(B, n_out // C, C)          # [B, n_res, C]


# ---------------------------------------------------------------------------
# Kernel 2: the whole encoder, fused.  Grid over batch ("parallel").
# ---------------------------------------------------------------------------
def _encoder_kernel(x_ref, temb_ref, cinw_ref, cinb_ref,
                    n1g_ref, n1b_ref, c1w_ref, c1b_ref,
                    n2g_ref, n2b_ref, c2w_ref, c2b_ref,
                    ong_ref, onb_ref, cow_ref, cob_ref,
                    oh_ref, ohT_ref,
                    o_ref,
                    xpad_ref, col_ref,
                    *, H, W, C, G, eps, n_res):
    HW = H * W
    inv_n = 1.0 / float(HW * (C // G))
    oh = oh_ref[...]                              # [C, G] f32
    ohT = ohT_ref[...]                            # [G, C] f32 (precomputed transpose)
    temb = temb_ref[0]                            # [n_res, C]

    # Zero the halo scratch once per grid step; only the interior is rewritten
    # by each conv, so the zero border survives across all convs of this step.
    xpad_ref[...] = jnp.zeros_like(xpad_ref)

    def conv3x3(x2d, w_bf16, bias_row):
        """x2d: [HW, C] f32 -> [HW, Cout] f32 (3x3, stride 1, zero pad 1)."""
        # Aligned interior store into the zero-haloed VMEM scratch.
        xpad_ref[1:H + 1, _PAD_LEFT:_PAD_LEFT + W, :] = x2d.reshape(H, W, C)
        xp = xpad_ref[...]
        # im2col into VMEM scratch -> one big MXU matmul (K = 9*C).
        for tap in range(9):
            dy, dx = tap // 3, tap % 3
            patch = xp[dy:dy + H, _PAD_LEFT - 1 + dx:_PAD_LEFT - 1 + dx + W, :]
            col_ref[:, tap * C:(tap + 1) * C] = patch.reshape(HW, C)
        acc = jnp.dot(col_ref[...].astype(jnp.bfloat16), w_bf16,
                      preferred_element_type=jnp.float32)
        return acc + bias_row

    def gn_silu(x2d, gamma, beta):
        """GroupNorm (f32 statistics via one-hot matmul) fused with SiLU."""
        csum = jnp.sum(x2d, axis=0, keepdims=True)                       # [1, C]
        mean_c = jnp.dot(jnp.dot(csum, oh, preferred_element_type=jnp.float32),
                         ohT, preferred_element_type=jnp.float32) * inv_n
        d = x2d - mean_c
        csq = jnp.sum(d * d, axis=0, keepdims=True)
        var_c = jnp.dot(jnp.dot(csq, oh, preferred_element_type=jnp.float32),
                        ohT, preferred_element_type=jnp.float32) * inv_n
        y = d * jax.lax.rsqrt(var_c + eps) * gamma + beta
        return y * jax.nn.sigmoid(y)                                     # SiLU

    # conv_in (input channels are zero-padded to C once in the wrapper; the
    # extra weight rows are zero, so the result is identical to the 3-channel conv).
    h = conv3x3(x_ref[0].reshape(HW, C).astype(jnp.float32),
                cinw_ref[...], cinb_ref[...])

    # 2 down-block resnets + 2 mid-block resnets (resnet_time_scale_shift="default",
    # output_scale_factor=1, dropout is a no-op in eval; temb folded into conv1 bias).
    for r in range(n_res):
        res = h
        y = gn_silu(h, n1g_ref[r:r + 1, :], n1b_ref[r:r + 1, :])
        y = conv3x3(y, c1w_ref[r], c1b_ref[r:r + 1, :] + temb[r:r + 1, :])
        y = gn_silu(y, n2g_ref[r:r + 1, :], n2b_ref[r:r + 1, :])
        y = conv3x3(y, c2w_ref[r], c2b_ref[r:r + 1, :])
        h = res + y
    # TODO(synk): UNetMidBlock2D self-attention (between the two mid resnets,
    # mid_block_add_attention=True, attention_head_dim=1) is not implemented --
    # its definition is not part of the provided source module.

    # conv_norm_out + conv_act (SiLU) + conv_out
    y = gn_silu(h, ong_ref[...], onb_ref[...])
    out = conv3x3(y, cow_ref[...], cob_ref[...])                         # [HW, 2*out_ch]
    o_ref[0] = out.reshape(H, W, cow_ref.shape[-1])


def encoder_forward_fused(x_nhwc, temb, p):
    B, H, W, C = x_nhwc.shape
    G = p["oh"].shape[-1]
    n_res = p["norm1_g"].shape[0]
    Cout = p["conv_out_b"].shape[-1]

    def rep(shape):                                # full-array, grid-invariant block
        nd = len(shape)
        return pl.BlockSpec(shape, lambda i, _nd=nd: (0,) * _nd)

    kernel = functools.partial(_encoder_kernel, H=H, W=W, C=C, G=G,
                               eps=1e-6, n_res=n_res)
    return pl.pallas_call(
        kernel,
        out_shape=jax.ShapeDtypeStruct((B, H, W, Cout), jnp.float32),
        grid=(B,),
        in_specs=[
            pl.BlockSpec((1, H, W, C), lambda i: (i, 0, 0, 0)),
            pl.BlockSpec((1, n_res, C), lambda i: (i, 0, 0)),
            rep(p["conv_in_w"].shape), rep(p["conv_in_b"].shape),
            rep(p["norm1_g"].shape), rep(p["norm1_b"].shape),
            rep(p["conv1_w"].shape), rep(p["conv1_b"].shape),
            rep(p["norm2_g"].shape), rep(p["norm2_b"].shape),
            rep(p["conv2_w"].shape), rep(p["conv2_b"].shape),
            rep(p["out_norm_g"].shape), rep(p["out_norm_b"].shape),
            rep(p["conv_out_w"].shape), rep(p["conv_out_b"].shape),
            rep(p["oh"].shape), rep(p["ohT"].shape),
        ],
        out_specs=pl.BlockSpec((1, H, W, Cout), lambda i: (i, 0, 0, 0)),
        scratch_shapes=[
            pltpu.VMEM((H + 2, _PAD_LEFT + W + 8, C), jnp.float32),  # zero-haloed conv buffer
            pltpu.VMEM((H * W, 9 * C), jnp.float32),                 # im2col staging
        ],
        compiler_params=pltpu.CompilerParams(
            dimension_semantics=("parallel",)),
    )(x_nhwc, temb,
      p["conv_in_w"], p["conv_in_b"],
      p["norm1_g"], p["norm1_b"], p["conv1_w"], p["conv1_b"],
      p["norm2_g"], p["norm2_b"], p["conv2_w"], p["conv2_b"],
      p["out_norm_g"], p["out_norm_b"], p["conv_out_w"], p["conv_out_b"],
      p["oh"], p["ohT"])


# ---------------------------------------------------------------------------
# Parameters (deterministic synthetic init; shapes follow the module defaults:
# in=3, out=3, block_out_channels=(64,), layers_per_block=2, groups=32,
# temb_channels=256, double_z=True, freq_shift=0, flip_sin_to_cos=True).
# Conv weights are stored in im2col layout [9*Cin, Cout] and bf16 (MXU operands).
# ---------------------------------------------------------------------------
def init_params(key, in_ch=3, out_ch=3, block_ch=64, temb_ch=256,
                num_groups=32, double_z=True, layers_per_block=2):
    C = block_ch
    timestep_input_dim = max(128, C)
    half = timestep_input_dim // 2
    exponent = -math.log(10000.0) * jnp.arange(half, dtype=jnp.float32) / float(half)
    freqs = jnp.exp(exponent).reshape(1, half)                 # freq_shift = 0

    keys = iter(jax.random.split(key, 64))

    def nrm(shape, scale=0.05):
        return scale * jax.random.normal(next(keys), shape, jnp.float32)

    def conv_w(cin, cout, pad_cin_to=None):
        w = nrm((3, 3, cin, cout))
        if pad_cin_to is not None and pad_cin_to > cin:
            w = jnp.pad(w, ((0, 0), (0, 0), (0, pad_cin_to - cin), (0, 0)))
            cin = pad_cin_to
        return w.reshape(9 * cin, cout).astype(jnp.bfloat16)   # im2col layout

    # 2 down resnets (single DownEncoderBlock2D, final block -> no downsample)
    # + 2 mid resnets (UNetMidBlock2D), all C -> C, stacked along a leading axis.
    n_res = layers_per_block + 2
    c1w = jnp.stack([conv_w(C, C) for _ in range(n_res)])
    c1b = jnp.stack([nrm((C,)) for _ in range(n_res)])
    c2w = jnp.stack([conv_w(C, C) for _ in range(n_res)])
    c2b = jnp.stack([nrm((C,)) for _ in range(n_res)])
    tw = jnp.concatenate([nrm((temb_ch, C)) for _ in range(n_res)], axis=1)
    tb = jnp.concatenate([nrm((C,)) for _ in range(n_res)]).reshape(1, n_res * C)

    conv_out_ch = 2 * out_ch if double_z else out_ch
    gsize = C // num_groups
    oh = jnp.eye(num_groups, dtype=jnp.float32)[jnp.arange(C) // gsize]   # [C, G]

    return dict(
        time_freqs=freqs,
        time_w1=nrm((timestep_input_dim, temb_ch)), time_b1=nrm((1, temb_ch)),
        time_w2=nrm((temb_ch, temb_ch)), time_b2=nrm((1, temb_ch)),
        time_proj_w=tw, time_proj_b=tb,
        conv_in_w=conv_w(in_ch, C, pad_cin_to=C), conv_in_b=nrm((1, C)),
        norm1_g=jnp.ones((n_res, C), jnp.float32),
        norm1_b=jnp.zeros((n_res, C), jnp.float32),
        conv1_w=c1w, conv1_b=c1b,
        norm2_g=jnp.ones((n_res, C), jnp.float32),
        norm2_b=jnp.zeros((n_res, C), jnp.float32),
        conv2_w=c2w, conv2_b=c2b,
        out_norm_g=jnp.ones((1, C), jnp.float32),
        out_norm_b=jnp.zeros((1, C), jnp.float32),
        conv_out_w=conv_w(C, conv_out_ch), conv_out_b=nrm((1, conv_out_ch)),
        oh=oh, ohT=oh.T,
    )


# ---------------------------------------------------------------------------
# Full forward (TimeAwareEncoder.forward), NCHW in / NCHW out.
# ---------------------------------------------------------------------------
def time_aware_encoder_forward(sample_nchw, timesteps, p):
    B = sample_nchw.shape[0]
    C = p["conv_in_b"].shape[-1]

    timesteps = jnp.asarray(timesteps)
    if timesteps.ndim == 0:
        timesteps = timesteps[None]
    t = timesteps.astype(jnp.float32) * jnp.ones((B,), jnp.float32)

    temb = time_embed(t, p)                                      # [B, 4, C]

    x = jnp.transpose(sample_nchw, (0, 2, 3, 1)).astype(jnp.float32)   # NCHW -> NHWC
    cin = x.shape[-1]
    if cin < C:                                                  # one-time lane-dense channel pad
        x = jnp.pad(x, ((0, 0), (0, 0), (0, 0), (0, C - cin)))

    out = encoder_forward_fused(x, temb, p)                      # [B, H, W, 2*out_ch]
    return jnp.transpose(out, (0, 3, 1, 2))                      # NHWC -> NCHW


if __name__ == "__main__":
    key = jax.random.PRNGKey(0)
    k_param, k_x = jax.random.split(key)
    params = init_params(k_param)

    # batch=2, in_channels=3, spatial=16x16, scalar integer timestep
    sample = jax.random.normal(k_x, (2, 3, 16, 16), jnp.float32)
    timesteps = jnp.array(7, dtype=jnp.int32)

    out = time_aware_encoder_forward(sample, timesteps, params)
    out = jax.block_until_ready(out)

    assert out.shape == (2, 6, 16, 16), out.shape                # double_z -> 2*out_channels
    assert bool(jnp.all(jnp.isfinite(out)))
    print("KERNEL_OK")
</pallas_src>

<mosaic_0001>
module attributes {stable_mosaic.version = 11 : i64} {
  func.func @_time_embed_kernel(%arg0: memref<2x1xf32, #tpu.memory_space<vmem>>, %arg1: memref<1x64xf32, #tpu.memory_space<vmem>>, %arg2: memref<128x256xf32, #tpu.memory_space<vmem>>, %arg3: memref<1x256xf32, #tpu.memory_space<vmem>>, %arg4: memref<256x256xf32, #tpu.memory_space<vmem>>, %arg5: memref<1x256xf32, #tpu.memory_space<vmem>>, %arg6: memref<256x256xf32, #tpu.memory_space<vmem>>, %arg7: memref<1x256xf32, #tpu.memory_space<vmem>>, %arg8: memref<2x256xf32, #tpu.memory_space<vmem>>) attributes {dimension_semantics = [], scalar_prefetch = 0 : i64, scratch_operands = 0 : i64, tpu.core_type = #tpu.core_type<tc>} {
    %c0 = arith.constant 0 : index
    %c0_0 = arith.constant 0 : index
    %0 = vector.load %arg0[%c0, %c0_0] : memref<2x1xf32, #tpu.memory_space<vmem>>, vector<2x1xf32>
    %c0_1 = arith.constant 0 : index
    %c0_2 = arith.constant 0 : index
    %1 = vector.load %arg1[%c0_1, %c0_2] : memref<1x64xf32, #tpu.memory_space<vmem>>, vector<1x64xf32>
    %2 = vector.broadcast %0 : vector<2x1xf32> to vector<2x64xf32>
    %3 = vector.broadcast %1 : vector<1x64xf32> to vector<2x64xf32>
    %4 = arith.mulf %2, %3 : vector<2x64xf32>
    %5 = math.cos %4 : vector<2x64xf32>
    %6 = math.sin %4 : vector<2x64xf32>
    %7 = tpu.concatenate %5, %6 in 1 : vector<2x64xf32>, vector<2x64xf32> -> vector<2x128xf32>
    %c0_3 = arith.constant 0 : index
    %c0_4 = arith.constant 0 : index
    %8 = vector.load %arg2[%c0_3, %c0_4] : memref<128x256xf32, #tpu.memory_space<vmem>>, vector<128x256xf32>
    %cst = arith.constant dense<0.000000e+00> : vector<2x256xf32>
    %9 = tpu.matmul %7, %8, %cst {dimension_numbers = #tpu.dot_dimension_numbers<[1], [0], [0], [1], [0, 0, 1, 1], [], []>} : vector<2x128xf32>, vector<128x256xf32>, vector<2x256xf32> -> vector<2x256xf32>
    %c0_5 = arith.constant 0 : index
    %c0_6 = arith.constant 0 : index
    %10 = vector.load %arg3[%c0_5, %c0_6] : memref<1x256xf32, #tpu.memory_space<vmem>>, vector<1x256xf32>
    %11 = vector.broadcast %10 : vector<1x256xf32> to vector<2x256xf32>
    %12 = arith.addf %9, %11 : vector<2x256xf32>
    %13 = arith.negf %12 : vector<2x256xf32>
    %14 = math.exp %13 : vector<2x256xf32>
    %cst_7 = arith.constant 1.000000e+00 : f32
    %15 = vector.broadcast %cst_7 : f32 to vector<2x256xf32>
    %16 = arith.addf %15, %14 : vector<2x256xf32>
    %17 = arith.divf %15, %16 : vector<2x256xf32>
    %18 = arith.mulf %12, %17 : vector<2x256xf32>
    %c0_8 = arith.constant 0 : index
    %c0_9 = arith.constant 0 : index
    %19 = vector.load %arg4[%c0_8, %c0_9] : memref<256x256xf32, #tpu.memory_space<vmem>>, vector<256x256xf32>
    %cst_10 = arith.constant dense<0.000000e+00> : vector<2x256xf32>
    %20 = tpu.matmul %18, %19, %cst_10 {dimension_numbers = #tpu.dot_dimension_numbers<[1], [0], [0], [1], [0, 0, 1, 1], [], []>} : vector<2x256xf32>, vector<256x256xf32>, vector<2x256xf32> -> vector<2x256xf32>
    %c0_11 = arith.constant 0 : index
    %c0_12 = arith.constant 0 : index
    %21 = vector.load %arg5[%c0_11, %c0_12] : memref<1x256xf32, #tpu.memory_space<vmem>>, vector<1x256xf32>
    %22 = vector.broadcast %21 : vector<1x256xf32> to vector<2x256xf32>
    %23 = arith.addf %20, %22 : vector<2x256xf32>
    %24 = arith.negf %23 : vector<2x256xf32>
    %25 = math.exp %24 : vector<2x256xf32>
    %cst_13 = arith.constant 1.000000e+00 : f32
    %26 = vector.broadcast %cst_13 : f32 to vector<2x256xf32>
    %27 = arith.addf %26, %25 : vector<2x256xf32>
    %28 = arith.divf %26, %27 : vector<2x256xf32>
    %29 = arith.mulf %23, %28 : vector<2x256xf32>
    %c0_14 = arith.constant 0 : index
    %c0_15 = arith.constant 0 : index
    %30 = vector.load %arg6[%c0_14, %c0_15] : memref<256x256xf32, #tpu.memory_space<vmem>>, vector<256x256xf32>
    %cst_16 = arith.constant dense<0.000000e+00> : vector<2x256xf32>
    %31 = tpu.matmul %29, %30, %cst_16 {dimension_numbers = #tpu.dot_dimension_numbers<[1], [0], [0], [1], [0, 0, 1, 1], [], []>} : vector<2x256xf32>, vector<256x256xf32>, vector<2x256xf32> -> vector<2x256xf32>
    %c0_17 = arith.constant 0 : index
    %c0_18 = arith.constant 0 : index
    %32 = vector.load %arg7[%c0_17, %c0_18] : memref<1x256xf32, #tpu.memory_space<vmem>>, vector<1x256xf32>
    %33 = vector.broadcast %32 : vector<1x256xf32> to vector<2x256xf32>
    %34 = arith.addf %31, %33 : vector<2x256xf32>
    %c0_19 = arith.constant 0 : index
    %c0_20 = arith.constant 0 : index
    %35 = vector.load %arg8[%c0_19, %c0_20] : memref<2x256xf32, #tpu.memory_space<vmem>>, vector<2x256xf32>
    tpu.vector_store %arg8[%c0_19, %c0_20], %34 {strides = array<i32>} : memref<2x256xf32, #tpu.memory_space<vmem>>, vector<2x256xf32>,
    return
  }
}

</mosaic_0001>

<llo_original>
// kernel: tpu_custom_call.1
$region0: #{tpu_custom_call.1}
  #allocation0 [shape = 'u32[]', space=smem, size = 0x4, offset = 0x4, fixed_abs, tag = 'smem constant byte address 0x4 - core index']
  #allocation1 [shape = 'u32[144,128]{1,0:T(1,128)}', space=vmem, size = 0x12000, scoped, tag = 'internal scratch']
  %s0 = inlined_call_operand.vmem [shape: f32[2,1], index: 0, kind: input, shape index: {}]
  %s1 = inlined_call_operand.vmem [shape: f32[1,64], index: 1, kind: input, shape index: {}]
  %s2 = inlined_call_operand.hbm [shape: f32[128,256], index: 2, kind: input, shape index: {}]
  %s3 = inlined_call_operand.vmem [shape: f32[1,256], index: 3, kind: input, shape index: {}]
  %s4 = inlined_call_operand.hbm [shape: f32[256,256], index: 4, kind: input, shape index: {}]
  %s5 = inlined_call_operand.vmem [shape: f32[1,256], index: 5, kind: input, shape index: {}]
  %s6 = inlined_call_operand.hbm [shape: f32[256,256], index: 6, kind: input, shape index: {}]
  %s7 = inlined_call_operand.vmem [shape: f32[1,256], index: 7, kind: input, shape index: {}]
  %s8 = inlined_call_operand.hbm [shape: f32[2,256], index: 8, kind: output, shape index: {}]
  %s9 = sld [smem:[#allocation0]]
  $region54: #{tpu_custom_call.1} parent=0
    _
  %s11 = ssub.s32 1, %s9
  %s12 = scalar_select 0, %s11, %s9
  $region1: #{tpu_custom_call.1} parent=0
    #allocation2 [shape = 'u8[131072]{0}', space=vmem, size = 0x20000, scoped, tag = 'input window, operand 2, single buffered']
    #allocation3 [shape = 's32[1]{0}', space=sflag, size = 0x4, scoped, tag = 'scoped memory for tpu_custom_call.1']
    #allocation4 [shape = 's32[1]{0}', space=sflag, size = 0x4, scoped, tag = 'scoped memory for tpu_custom_call.1']
    #allocation5 [shape = 'u8[262144]{0}', space=vmem, size = 0x40000, scoped, tag = 'input window, operand 4, single buffered']
    #allocation6 [shape = 's32[1]{0}', space=sflag, size = 0x4, scoped, tag = 'scoped memory for tpu_custom_call.1']
    #allocation7 [shape = 'u8[262144]{0}', space=vmem, size = 0x40000, scoped, tag = 'input window, operand 6, single buffered']
    #allocation8 [shape = 'u8[2048]{0}', space=vmem, size = 0x800, scoped, tag = 'output window, operand 0, single buffered']
    %13 = vsyncpa [#allocation3], 0
    %14 = vsyncpa [#allocation6], 0
    %15 = vsyncpa [#allocation4], 0
    // Predicated region
    $region2: #{tpu_custom_call.1} parent=1 // pred_check
      _
    $region3: #{tpu_custom_call.1} parent=1 // pred_check_branch
      %17 = sbr.rel (0) target = $region5
    $region4: #{tpu_custom_call.1} parent=1 // pred_region
      _
    $region5: #{tpu_custom_call.1} parent=1 // pred_fallthru
      _
    // Predicated region
    $region6: #{tpu_custom_call.1} parent=1 // pred_check
      _
    $region7: #{tpu_custom_call.1} parent=1 // pred_check_branch
      %19 = sbr.rel (0) target = $region9
    $region8: #{tpu_custom_call.1} parent=1 // pred_region
      _
    $region9: #{tpu_custom_call.1} parent=1 // pred_fallthru
      _
    // Predicated region
    $region10: #{tpu_custom_call.1} parent=1 // pred_check
      _
    $region11: #{tpu_custom_call.1} parent=1 // pred_check_branch
      %21 = sbr.rel (0) target = $region13
    $region12: #{tpu_custom_call.1} parent=1 // pred_region
      %s23 = ssub.s32 4096, 4096
      %24 = vsyncadd [#allocation3], %s23
      %s25 = sshll.u32 [#allocation2], 4
      %s26 = int_to_ptr.vmem [resolvable:$true] %s25
      %31 = dma.hbm_to_vmem [thread:$0]  %s2, 4096, %s26, [#allocation3], 256, 256, 16
    $region13: #{tpu_custom_call.1} parent=1 // pred_fallthru
      _
    // Predicated region
    $region14: #{tpu_custom_call.1} parent=1 // pred_check
      _
    $region15: #{tpu_custom_call.1} parent=1 // pred_check_branch
      %33 = sbr.rel (0) target = $region17
    $region16: #{tpu_custom_call.1} parent=1 // pred_region
      _
    $region17: #{tpu_custom_call.1} parent=1 // pred_fallthru
      _
    // Predicated region
    $region18: #{tpu_custom_call.1} parent=1 // pred_check
      _
    $region19: #{tpu_custom_call.1} parent=1 // pred_check_branch
      %35 = sbr.rel (0) target = $region21
    $region20: #{tpu_custom_call.1} parent=1 // pred_region
      %s37 = ssub.s32 8192, 8192
      %38 = vsyncadd [#allocation6], %s37
      %s39 = sshll.u32 [#allocation5], 4
      %s40 = int_to_ptr.vmem [resolvable:$true] %s39
      %45 = dma.hbm_to_vmem [thread:$0]  %s4, 8192, %s40, [#allocation6], 256, 256, 16
    $region21: #{tpu_custom_call.1} parent=1 // pred_fallthru
      _
    // Predicated region
    $region22: #{tpu_custom_call.1} parent=1 // pred_check
      _
    $region23: #{tpu_custom_call.1} parent=1 // pred_check_branch
      %47 = sbr.rel (0) target = $region25
    $region24: #{tpu_custom_call.1} parent=1 // pred_region
      _
    $region25: #{tpu_custom_call.1} parent=1 // pred_fallthru
      _
    // Predicated region
    $region26: #{tpu_custom_call.1} parent=1 // pred_check
      _
    $region27: #{tpu_custom_call.1} parent=1 // pred_check_branch
      %49 = sbr.rel (0) target = $region29
    $region28: #{tpu_custom_call.1} parent=1 // pred_region
      %s51 = ssub.s32 8192, 8192
      %52 = vsyncadd [#allocation6], %s51
      %s53 = sshll.u32 [#allocation7], 4
      %s54 = int_to_ptr.vmem [resolvable:$true] %s53
      %59 = dma.hbm_to_vmem [thread:$0]  %s6, 8192, %s54, [#allocation6], 256, 256, 16
    $region29: #{tpu_custom_call.1} parent=1 // pred_fallthru
      _
    // Predicated region
    $region30: #{tpu_custom_call.1} parent=1 // pred_check
      _
    $region31: #{tpu_custom_call.1} parent=1 // pred_check_branch
      %61 = sbr.rel (0) target = $region33
    $region32: #{tpu_custom_call.1} parent=1 // pred_region
      _
    $region33: #{tpu_custom_call.1} parent=1 // pred_fallthru
      _
    // Predicated region
    $region34: #{tpu_custom_call.1} parent=1 // pred_check
      _
    $region35: #{tpu_custom_call.1} parent=1 // pred_check_branch
      %63 = sbr.rel (0) target = $region37
    $region36: #{tpu_custom_call.1} parent=1 // pred_region
      %64 = dma.done [#allocation3], 4096
    $region37: #{tpu_custom_call.1} parent=1 // pred_fallthru
      _
    // Predicated region
    $region38: #{tpu_custom_call.1} parent=1 // pred_check
      _
    $region39: #{tpu_custom_call.1} parent=1 // pred_check_branch
      %66 = sbr.rel (0) target = $region41
    $region40: #{tpu_custom_call.1} parent=1 // pred_region
      %67 = dma.done [#allocation6], 8192
    $region41: #{tpu_custom_call.1} parent=1 // pred_fallthru
      _
    // Predicated region
    $region42: #{tpu_custom_call.1} parent=1 // pred_check
      _
    $region43: #{tpu_custom_call.1} parent=1 // pred_check_branch
      %69 = sbr.rel (0) target = $region45
    $region44: #{tpu_custom_call.1} parent=1 // pred_region
      %70 = dma.done [#allocation6], 8192
    $region45: #{tpu_custom_call.1} parent=1 // pred_fallthru
      _
    %v71 = vld [vmem:[%s0] sm:$0x3]
    %v72 = vld [vmem:[%s1] sm:$0x1]
    %74 = vset.pattern.permute.xlu0 0
    %75 = vperm.xlu0 %74, %v71
    %v76 = vpop.permute.xlu0 %75
    %v79 = vlaneseq
    %v80 = vshrl.u32 %v79, 7
    %v81 = vsub.s32 0, %v80
    %v82 = vrot.slane %v72, %v81
    %v84 = vmul.f32 %v76, %v82
    %v85 = vand.u32 2147483647, %v84
    %vm86 = vcmp.le.f32.partialorder %v85, 0.7853982
    %vm87 = vcmp.lt.s32.totalorder %v84, 0
    %v88 = vand.u32 %v84, 2139095040
    %v89 = vshrl.u32 %v88, 23
    %v90 = vsub.s32 %v89, 127
    %v91 = vand.u32 2147483647, %v84
    %v92 = vand.u32 %v91, 8388607
    %v93 = vor.u32 %v92, 8388608
    %v94 = vsub.s32 0, %v93
    %v95 = vadd.s32 %v90, 1
    %vm96 = vcmp.gt.s32.totalorder %v95, 0
    %v97 = vsel %vm96, %v95, 0
    %v98 = vshrl.u32 %v97, 5
    %v99 = vand.u32 %v97, 31
    %v100 = vsub.s32 32, %v99
    %v101 = vshrl.u32 683565275, %v100
    %v102 = vshll.u32 683565275, %v99
    %v103 = vshrl.u32 2475754826, %v100
    %v104 = vor.u32 %v102, %v103
    %v105 = vshll.u32 2475754826, %v99
    %v106 = vshrl.u32 2131351028, %v100
    %v107 = vor.u32 %v105, %v106
    %v108 = vshll.u32 2131351028, %v99
    %v109 = vshrl.u32 2102212464, %v100
    %v110 = vor.u32 %v108, %v109
    %v111 = vshll.u32 2102212464, %v99
    %v112 = vshrl.u32 920167782, %v100
    %v113 = vor.u32 %v111, %v112
    %v114 = vshll.u32 920167782, %v99
    %v115 = vshrl.u32 1326507024, %v100
    %v116 = vor.u32 %v114, %v115
    %vm117 = vcmp.lt.s32.totalorder %v98, 1
    %vm118 = vcmp.lt.s32.totalorder %v98, 2
    %vm119 = vcmp.lt.s32.totalorder %v98, 3
    %vm120 = vcmp.lt.s32.totalorder %v98, 4
    %v121 = vsel %vm117, %v101, %v104
    %v122 = vsel %vm120, %v110, 2102212464
    %v123 = vsel %vm119, %v107, %v122
    %v124 = vsel %vm118, %v121, %v123
    %v125 = vsel %vm117, %v104, %v107
    %v126 = vsel %vm120, %v113, 920167782
    %v127 = vsel %vm119, %v110, %v126
    %v128 = vsel %vm118, %v125, %v127
    %v129 = vsel %vm117, %v107, %v110
    %v130 = vsel %vm120, %v116, 1326507024
    %v131 = vsel %vm119, %v113, %v130
    %v132 = vsel %vm118, %v129, %v131
    %v133 = vshll.u32 %v93, 8
    %v134 = vmul.u32.u64.compose %v133, %v132
    %v135 = vextract.low.u32 %v134
    %v136 = vextract.high.u32 %v134
    %v137 = vmul.u32.u64.compose %v133, %v128
    %v138 = vextract.low.u32 %v137
    %v139 = vextract.high.u32 %v137
    %v140 = vmul.u32 %v133, %v124
    %v141 = vadd.s32 %v136, %v138
    %vm142 = vc.u32 %v136, %v138
    %v143 = vadd.s32 %v139, 1
    %v144 = vsel %vm142, %v143, %v139
    %v145 = vadd.s32 %v140, %v144
    %v146 = vadd.s32 %v145, 536870912
    %v147 = vshrl.u32 %v146, 30
    %v148 = vshll.u32 %v147, 30
    %v149 = vsub.s32 %v145, %v148
    %vm150 = vcmp.lt.s32.totalorder %v149, 0
    %v151 = vsub.s32 0, %v149
    %v152 = vsel %vm150, %v151, %v149
    %v153 = vclz %v152
    %v154 = vsub.s32 %v153, 2
    %vm155 = vcmp.gt.s32.totalorder 0, %v154
    %v156 = vsel %vm155, 0, %v154
    %v157 = vsub.s32 32, %v156
    %v158 = vshll.u32 %v149, %v156
    %v159 = vshrl.u32 %v141, %v157
    %v160 = vor.u32 %v158, %v159
    %v161 = vsub.s32 4294967266, %v156
    %v162 = vadd.s32 %v161, 127
    %v163 = vshll.u32 %v162, 23
    %v164 = vor.u32 4788187, %v163
    %v165 = vand.u32 2147483647, %v164
    %v167 = vcvt.s32.f32 %v160
    %v168 = vmul.f32 %v167, %v165
    %v169 = vxor.u32 %v168, 2147483648
    %v170 = vsel %vm87, %v169, %v168
    %v171 = vsub.s32 4, %v147
    %v172 = vsel %vm87, %v171, %v147
    %v173 = vsel %vm86, %v84, %v170
    %v174 = vsel %vm86, 0, %v172
    %v175 = vcosq.f32.pop %v173
    %v176 = vsinq.f32.pop %v173
    %vm177 = vweird.f32 %v84
    %v178 = vand.u32 %v174, 3
    %vm179 = vcmp.lt.s32.totalorder %v178, 2
    %vm180 = vcmp.eq.s32.totalorder %v178, 0
    %v181 = vxor.u32 %v176, 2147483648
    %v182 = vsel %vm180, %v175, %v181
    %vm183 = vcmp.eq.s32.totalorder %v178, 2
    %v184 = vxor.u32 %v175, 2147483648
    %v185 = vsel %vm183, %v184, %v176
    %v186 = vsel %vm179, %v182, %v185
    %v187 = vsel %vm177, nan, %v186
    %v188 = vand.u32 2147483647, %v84
    %vm189 = vcmp.le.f32.partialorder %v188, 0.7853982
    %vm190 = vcmp.lt.s32.totalorder %v84, 0
    %v191 = vand.u32 %v84, 2139095040
    %v192 = vshrl.u32 %v191, 23
    %v193 = vsub.s32 %v192, 127
    %v194 = vand.u32 2147483647, %v84
    %v195 = vand.u32 %v194, 8388607
    %v196 = vor.u32 %v195, 8388608
    %v197 = vsub.s32 0, %v196
    %v198 = vadd.s32 %v193, 1
    %vm199 = vcmp.gt.s32.totalorder %v198, 0
    %v200 = vsel %vm199, %v198, 0
    %v201 = vshrl.u32 %v200, 5
    %v202 = vand.u32 %v200, 31
    %v203 = vsub.s32 32, %v202
    %v204 = vshrl.u32 683565275, %v203
    %v205 = vshll.u32 683565275, %v202
    %v206 = vshrl.u32 2475754826, %v203
    %v207 = vor.u32 %v205, %v206
    %v208 = vshll.u32 2475754826, %v202
    %v209 = vshrl.u32 2131351028, %v203
    %v210 = vor.u32 %v208, %v209
    %v211 = vshll.u32 2131351028, %v202
    %v212 = vshrl.u32 2102212464, %v203
    %v213 = vor.u32 %v211, %v212
    %v214 = vshll.u32 2102212464, %v202
    %v215 = vshrl.u32 920167782, %v203
    %v216 = vor.u32 %v214, %v215
    %v217 = vshll.u32 920167782, %v202
    %v218 = vshrl.u32 1326507024, %v203
    %v219 = vor.u32 %v217, %v218
    %vm220 = vcmp.lt.s32.totalorder %v201, 1
    %vm221 = vcmp.lt.s32.totalorder %v201, 2
    %vm222 = vcmp.lt.s32.totalorder %v201, 3
    %vm223 = vcmp.lt.s32.totalorder %v201, 4
    %v224 = vsel %vm220, %v204, %v207
    %v225 = vsel %vm223, %v213, 2102212464
    %v226 = vsel %vm222, %v210, %v225
    %v227 = vsel %vm221, %v224, %v226
    %v228 = vsel %vm220, %v207, %v210
    %v229 = vsel %vm223, %v216, 920167782
    %v230 = vsel %vm222, %v213, %v229
    %v231 = vsel %vm221, %v228, %v230
    %v232 = vsel %vm220, %v210, %v213
    %v233 = vsel %vm223, %v219, 1326507024
    %v234 = vsel %vm222, %v216, %v233
    %v235 = vsel %vm221, %v232, %v234
    %v236 = vshll.u32 %v196, 8
    %v237 = vmul.u32.u64.compose %v236, %v235
    %v238 = vextract.low.u32 %v237
    %v239 = vextract.high.u32 %v237
    %v240 = vmul.u32.u64.compose %v236, %v231
    %v241 = vextract.low.u32 %v240
    %v242 = vextract.high.u32 %v240
    %v243 = vmul.u32 %v236, %v227
    %v244 = vadd.s32 %v239, %v241
    %vm245 = vc.u32 %v239, %v241
    %v246 = vadd.s32 %v242, 1
    %v247 = vsel %vm245, %v246, %v242
    %v248 = vadd.s32 %v243, %v247
    %v249 = vadd.s32 %v248, 536870912
    %v250 = vshrl.u32 %v249, 30
    %v251 = vshll.u32 %v250, 30
    %v252 = vsub.s32 %v248, %v251
    %vm253 = vcmp.lt.s32.totalorder %v252, 0
    %v254 = vsub.s32 0, %v252
    %v255 = vsel %vm253, %v254, %v252
    %v256 = vclz %v255
    %v257 = vsub.s32 %v256, 2
    %vm258 = vcmp.gt.s32.totalorder 0, %v257
    %v259 = vsel %vm258, 0, %v257
    %v260 = vsub.s32 32, %v259
    %v261 = vshll.u32 %v252, %v259
    %v262 = vshrl.u32 %v244, %v260
    %v263 = vor.u32 %v261, %v262
    %v264 = vsub.s32 4294967266, %v259
    %v265 = vadd.s32 %v264, 127
    %v266 = vshll.u32 %v265, 23
    %v267 = vor.u32 4788187, %v266
    %v268 = vand.u32 2147483647, %v267
    %v270 = vcvt.s32.f32 %v263
    %v271 = vmul.f32 %v270, %v268
    %v272 = vxor.u32 %v271, 2147483648
    %v273 = vsel %vm190, %v272, %v271
    %v274 = vsub.s32 4, %v250
    %v275 = vsel %vm190, %v274, %v250
    %v276 = vsel %vm189, %v84, %v273
    %v277 = vsel %vm189, 0, %v275
    %v278 = vcosq.f32.pop %v276
    %v279 = vsinq.f32.pop %v276
    %vm280 = vweird.f32 %v84
    %v281 = vadd.s32 %v277, 3
    %v282 = vand.u32 %v281, 3
    %vm283 = vcmp.lt.s32.totalorder %v282, 2
    %vm284 = vcmp.eq.s32.totalorder %v282, 0
    %v285 = vxor.u32 %v279, 2147483648
    %v286 = vsel %vm284, %v278, %v285
    %vm287 = vcmp.eq.s32.totalorder %v282, 2
    %v288 = vxor.u32 %v278, 2147483648
    %v289 = vsel %vm287, %v288, %v279
    %v290 = vsel %vm283, %v286, %v289
    %v291 = vsel %vm280, nan, %v290
    %293 = vrot.lane.b32.xlu0 %v291, 64
    %v294 = vpop.permute.xlu0 %293
    %vm296 = vcmask 523264
    %v297 = vsel %vm296, %v187, %v294
    %v298 = vld [vmem:[#allocation2] sm:$0xff]
    %v299 = vld [vmem:[#allocation2 + $0x8] sm:$0xff]
    %v300 = vld [vmem:[#allocation2 + $0x10] sm:$0xff]
    %v301 = vld [vmem:[#allocation2 + $0x18] sm:$0xff]
    %v302 = vld [vmem:[#allocation2 + $0x20] sm:$0xff]
    %v303 = vld [vmem:[#allocation2 + $0x28] sm:$0xff]
    %v304 = vld [vmem:[#allocation2 + $0x30] sm:$0xff]
    %v305 = vld [vmem:[#allocation2 + $0x38] sm:$0xff]
    %v306 = vld [vmem:[#allocation2 + $0x40] sm:$0xff]
    %v307 = vld [vmem:[#allocation2 + $0x48] sm:$0xff]
    %v308 = vld [vmem:[#allocation2 + $0x50] sm:$0xff]
    %v309 = vld [vmem:[#allocation2 + $0x58] sm:$0xff]
    %v310 = vld [vmem:[#allocation2 + $0x60] sm:$0xff]
    %v311 = vld [vmem:[#allocation2 + $0x68] sm:$0xff]
    %v312 = vld [vmem:[#allocation2 + $0x70] sm:$0xff]
    %v313 = vld [vmem:[#allocation2 + $0x78] sm:$0xff]
    %v314 = vld [vmem:[#allocation2 + $0x80] sm:$0xff]
    %v315 = vld [vmem:[#allocation2 + $0x88] sm:$0xff]
    %v316 = vld [vmem:[#allocation2 + $0x90] sm:$0xff]
    %v317 = vld [vmem:[#allocation2 + $0x98] sm:$0xff]
    %v318 = vld [vmem:[#allocation2 + $0xa0] sm:$0xff]
    %v319 = vld [vmem:[#allocation2 + $0xa8] sm:$0xff]
    %v320 = vld [vmem:[#allocation2 + $0xb0] sm:$0xff]
    %v321 = vld [vmem:[#allocation2 + $0xb8] sm:$0xff]
    %v322 = vld [vmem:[#allocation2 + $0xc0] sm:$0xff]
    %v323 = vld [vmem:[#allocation2 + $0xc8] sm:$0xff]
    %v324 = vld [vmem:[#allocation2 + $0xd0] sm:$0xff]
    %v325 = vld [vmem:[#allocation2 + $0xd8] sm:$0xff]
    %v326 = vld [vmem:[#allocation2 + $0xe0] sm:$0xff]
    %v327 = vld [vmem:[#allocation2 + $0xe8] sm:$0xff]
    %v328 = vld [vmem:[#allocation2 + $0xf0] sm:$0xff]
    %v329 = vld [vmem:[#allocation2 + $0xf8] sm:$0xff]
    %v330 = vld [vmem:[%s3] sm:$0x3]
    %v332 = vlaneseq
    %v333 = vshrl.u32 %v332, 7
    %v334 = vsub.s32 0, %v333
    %v335 = vrot.slane %v330, %v334
    %v336 = vlaneseq
    %v337 = vshrl.u32 %v336, 7
    %v338 = vsub.s32 1, %v337
    %v339 = vrot.slane %v330, %v338
    %342 = vmatprep.subr.mxu0 %v299
    %343 = vmatpush1.msra.mxu0 %v298
    %344 = vmatprep.subr.mxu0 %v301
    %345 = vmatpush1.msra.mxu0 %v300
    %346 = vmatprep.subr.mxu0 %v303
    %347 = vmatpush1.msra.mxu0 %v302
    %348 = vmatprep.subr.mxu0 %v305
    %349 = vmatpush1.msra.mxu0 %v304
    %350 = vmatprep.subr.mxu0 %v307
    %351 = vmatpush1.msra.mxu0 %v306
    %352 = vmatprep.subr.mxu0 %v309
    %353 = vmatpush1.msra.mxu0 %v308
    %354 = vmatprep.subr.mxu0 %v311
    %355 = vmatpush1.msra.mxu0 %v310
    %356 = vmatprep.subr.mxu0 %v313
    %357 = vmatpush1.msra.mxu0 %v312
    %358 = vmatprep.subr.mxu0 %v315
    %359 = vmatpush1.msra.mxu0 %v314
    %360 = vmatprep.subr.mxu0 %v317
    %361 = vmatpush1.msra.mxu0 %v316
    %362 = vmatprep.subr.mxu0 %v319
    %363 = vmatpush1.msra.mxu0 %v318
    %364 = vmatprep.subr.mxu0 %v321
    %365 = vmatpush1.msra.mxu0 %v320
    %366 = vmatprep.subr.mxu0 %v323
    %367 = vmatpush1.msra.mxu0 %v322
    %368 = vmatprep.subr.mxu0 %v325
    %369 = vmatpush1.msra.mxu0 %v324
    %370 = vmatprep.subr.mxu0 %v327
    %371 = vmatpush1.msra.mxu0 %v326
    %372 = vmatprep.subr.mxu0 %v329
    %373 = vmatpush1.msra.mxu0 %v328
    %374 = vmatprep.subr.mxu0 0.0
    %375 = vmatpush1.msra.mxu0 0.0
    %376 = vmatprep.subr.mxu0 0.0
    %377 = vmatpush1.msra.mxu0 0.0
    %378 = vmatprep.subr.mxu0 0.0
    %379 = vmatpush1.msra.mxu0 0.0
    %380 = vmatprep.subr.mxu0 0.0
    %381 = vmatpush1.msra.mxu0 0.0
    %382 = vmatprep.subr.mxu0 0.0
    %383 = vmatpush1.msra.mxu0 0.0
    %384 = vmatprep.subr.mxu0 0.0
    %385 = vmatpush1.msra.mxu0 0.0
    %386 = vmatprep.subr.mxu0 0.0
    %387 = vmatpush1.msra.mxu0 0.0
    %388 = vmatprep.subr.mxu0 0.0
    %389 = vmatpush1.msra.mxu0 0.0
    %390 = vmatprep.subr.mxu0 0.0
    %391 = vmatpush1.msra.mxu0 0.0
    %392 = vmatprep.subr.mxu0 0.0
    %393 = vmatpush1.msra.mxu0 0.0
    %394 = vmatprep.subr.mxu0 0.0
    %395 = vmatpush1.msra.mxu0 0.0
    %396 = vmatprep.subr.mxu0 0.0
    %397 = vmatpush1.msra.mxu0 0.0
    %398 = vmatprep.subr.mxu0 0.0
    %399 = vmatpush1.msra.mxu0 0.0
    %400 = vmatprep.subr.mxu0 0.0
    %401 = vmatpush1.msra.mxu0 0.0
    %402 = vmatprep.subr.mxu0 0.0
    %403 = vmatpush1.msra.mxu0 0.0
    %404 = vmatprep.subr.mxu0 0.0
    %405 = vmatpush1.msra.mxu0 0.0
    %406 = vmatprep.mubr.f32.mxu0 0.0
    %407 = vmatmul.mubr.f32.gmra.mrb[0].mxu0 %v297
    %v408 = vpop.f32.mrb[0].mxu0
    %v409 = vadd.f32 %v335, %v408
    %v410 = vpop.f32.mrb[0].mxu0
    %v411 = vadd.f32 %v339, %v410
    %412 = vdwg.mxu0
    %v413 = vxor.u32 %v409, 2147483648
    %v414 = vxor.u32 %v411, 2147483648
    %v415 = vmul.f32 %v413, 1.442695
    %v416 = vpow.pop %v415
    %v417 = vmul.f32 %v414, 1.442695
    %v418 = vpow.pop %v417
    %v419 = vadd.f32 %v416, 1.0
    %v420 = vadd.f32 %v418, 1.0
    %v421 = vrcp.pop %v419
    %v422 = vmul.f32 1.0, %v421
    %v423 = vrcp.pop %v420
    %v424 = vmul.f32 1.0, %v423
    %v425 = vmul.f32 %v409, %v422
    %v426 = vmul.f32 %v411, %v424
    %v427 = vld [vmem:[#allocation5] sm:$0xff]
    %v428 = vld [vmem:[#allocation5 + $0x8] sm:$0xff]
    %v429 = vld [vmem:[#allocation5 + $0x10] sm:$0xff]
    %v430 = vld [vmem:[#allocation5 + $0x18] sm:$0xff]
    %v431 = vld [vmem:[#allocation5 + $0x20] sm:$0xff]
    %v432 = vld [vmem:[#allocation5 + $0x28] sm:$0xff]
    %v433 = vld [vmem:[#allocation5 + $0x30] sm:$0xff]
    %v434 = vld [vmem:[#allocation5 + $0x38] sm:$0xff]
    %v435 = vld [vmem:[#allocation5 + $0x40] sm:$0xff]
    %v436 = vld [vmem:[#allocation5 + $0x48] sm:$0xff]
    %v437 = vld [vmem:[#allocation5 + $0x50] sm:$0xff]
    %v438 = vld [vmem:[#allocation5 + $0x58] sm:$0xff]
    %v439 = vld [vmem:[#allocation5 + $0x60] sm:$0xff]
    %v440 = vld [vmem:[#allocation5 + $0x68] sm:$0xff]
    %v441 = vld [vmem:[#allocation5 + $0x70] sm:$0xff]
    %v442 = vld [vmem:[#allocation5 + $0x78] sm:$0xff]
    %v443 = vld [vmem:[#allocation5 + $0x80] sm:$0xff]
    %v444 = vld [vmem:[#allocation5 + $0x88] sm:$0xff]
    %v445 = vld [vmem:[#allocation5 + $0x90] sm:$0xff]
    %v446 = vld [vmem:[#allocation5 + $0x98] sm:$0xff]
    %v447 = vld [vmem:[#allocation5 + $0xa0] sm:$0xff]
    %v448 = vld [vmem:[#allocation5 + $0xa8] sm:$0xff]
    %v449 = vld [vmem:[#allocation5 + $0xb0] sm:$0xff]
    %v450 = vld [vmem:[#allocation5 + $0xb8] sm:$0xff]
    %v451 = vld [vmem:[#allocation5 + $0xc0] sm:$0xff]
    %v452 = vld [vmem:[#allocation5 + $0xc8] sm:$0xff]
    %v453 = vld [vmem:[#allocation5 + $0xd0] sm:$0xff]
    %v454 = vld [vmem:[#allocation5 + $0xd8] sm:$0xff]
    %v455 = vld [vmem:[#allocation5 + $0xe0] sm:$0xff]
    %v456 = vld [vmem:[#allocation5 + $0xe8] sm:$0xff]
    %v457 = vld [vmem:[#allocation5 + $0xf0] sm:$0xff]
    %v458 = vld [vmem:[#allocation5 + $0xf8] sm:$0xff]
    %v459 = vld [vmem:[#allocation5 + $0x100] sm:$0xff]
    %v460 = vld [vmem:[#allocation5 + $0x108] sm:$0xff]
    %v461 = vld [vmem:[#allocation5 + $0x110] sm:$0xff]
    %v462 = vld [vmem:[#allocation5 + $0x118] sm:$0xff]
    %v463 = vld [vmem:[#allocation5 + $0x120] sm:$0xff]
    %v464 = vld [vmem:[#allocation5 + $0x128] sm:$0xff]
    %v465 = vld [vmem:[#allocation5 + $0x130] sm:$0xff]
    %v466 = vld [vmem:[#allocation5 + $0x138] sm:$0xff]
    %v467 = vld [vmem:[#allocation5 + $0x140] sm:$0xff]
    %v468 = vld [vmem:[#allocation5 + $0x148] sm:$0xff]
    %v469 = vld [vmem:[#allocation5 + $0x150] sm:$0xff]
    %v470 = vld [vmem:[#allocation5 + $0x158] sm:$0xff]
    %v471 = vld [vmem:[#allocation5 + $0x160] sm:$0xff]
    %v472 = vld [vmem:[#allocation5 + $0x168] sm:$0xff]
    %v473 = vld [vmem:[#allocation5 + $0x170] sm:$0xff]
    %v474 = vld [vmem:[#allocation5 + $0x178] sm:$0xff]
    %v475 = vld [vmem:[#allocation5 + $0x180] sm:$0xff]
    %v476 = vld [vmem:[#allocation5 + $0x188] sm:$0xff]
    %v477 = vld [vmem:[#allocation5 + $0x190] sm:$0xff]
    %v478 = vld [vmem:[#allocation5 + $0x198] sm:$0xff]
    %v479 = vld [vmem:[#allocation5 + $0x1a0] sm:$0xff]
    %v480 = vld [vmem:[#allocation5 + $0x1a8] sm:$0xff]
    %v481 = vld [vmem:[#allocation5 + $0x1b0] sm:$0xff]
    %v482 = vld [vmem:[#allocation5 + $0x1b8] sm:$0xff]
    %v483 = vld [vmem:[#allocation5 + $0x1c0] sm:$0xff]
    %v484 = vld [vmem:[#allocation5 + $0x1c8] sm:$0xff]
    %v485 = vld [vmem:[#allocation5 + $0x1d0] sm:$0xff]
    %v486 = vld [vmem:[#allocation5 + $0x1d8] sm:$0xff]
    %v487 = vld [vmem:[#allocation5 + $0x1e0] sm:$0xff]
    %v488 = vld [vmem:[#allocation5 + $0x1e8] sm:$0xff]
    %v489 = vld [vmem:[#allocation5 + $0x1f0] sm:$0xff]
    %v490 = vld [vmem:[#allocation5 + $0x1f8] sm:$0xff]
    %v491 = vld [vmem:[%s5] sm:$0x3]
    %v493 = vlaneseq
    %v494 = vshrl.u32 %v493, 7
    %v495 = vsub.s32 0, %v494
    %v496 = vrot.slane %v491, %v495
    %v497 = vlaneseq
    %v498 = vshrl.u32 %v497, 7
    %v499 = vsub.s32 1, %v498
    %v500 = vrot.slane %v491, %v499
    %503 = vmatprep.subr.mxu0 %v428
    %504 = vmatpush1.msra.mxu0 %v427
    %505 = vmatprep.subr.mxu0 %v430
    %506 = vmatpush1.msra.mxu0 %v429
    %507 = vmatprep.subr.mxu0 %v432
    %508 = vmatpush1.msra.mxu0 %v431
    %509 = vmatprep.subr.mxu0 %v434
    %510 = vmatpush1.msra.mxu0 %v433
    %511 = vmatprep.subr.mxu0 %v436
    %512 = vmatpush1.msra.mxu0 %v435
    %513 = vmatprep.subr.mxu0 %v438
    %514 = vmatpush1.msra.mxu0 %v437
    %515 = vmatprep.subr.mxu0 %v440
    %516 = vmatpush1.msra.mxu0 %v439
    %517 = vmatprep.subr.mxu0 %v442
    %518 = vmatpush1.msra.mxu0 %v441
    %519 = vmatprep.subr.mxu0 %v444
    %520 = vmatpush1.msra.mxu0 %v443
    %521 = vmatprep.subr.mxu0 %v446
    %522 = vmatpush1.msra.mxu0 %v445
    %523 = vmatprep.subr.mxu0 %v448
    %524 = vmatpush1.msra.mxu0 %v447
    %525 = vmatprep.subr.mxu0 %v450
    %526 = vmatpush1.msra.mxu0 %v449
    %527 = vmatprep.subr.mxu0 %v452
    %528 = vmatpush1.msra.mxu0 %v451
    %529 = vmatprep.subr.mxu0 %v454
    %530 = vmatpush1.msra.mxu0 %v453
    %531 = vmatprep.subr.mxu0 %v456
    %532 = vmatpush1.msra.mxu0 %v455
    %533 = vmatprep.subr.mxu0 %v458
    %534 = vmatpush1.msra.mxu0 %v457
    %535 = vmatprep.subr.mxu0 %v460
    %536 = vmatpush1.msra.mxu0 %v459
    %537 = vmatprep.subr.mxu0 %v462
    %538 = vmatpush1.msra.mxu0 %v461
    %539 = vmatprep.subr.mxu0 %v464
    %540 = vmatpush1.msra.mxu0 %v463
    %541 = vmatprep.subr.mxu0 %v466
    %542 = vmatpush1.msra.mxu0 %v465
    %543 = vmatprep.subr.mxu0 %v468
    %544 = vmatpush1.msra.mxu0 %v467
    %545 = vmatprep.subr.mxu0 %v470
    %546 = vmatpush1.msra.mxu0 %v469
    %547 = vmatprep.subr.mxu0 %v472
    %548 = vmatpush1.msra.mxu0 %v471
    %549 = vmatprep.subr.mxu0 %v474
    %550 = vmatpush1.msra.mxu0 %v473
    %551 = vmatprep.subr.mxu0 %v476
    %552 = vmatpush1.msra.mxu0 %v475
    %553 = vmatprep.subr.mxu0 %v478
    %554 = vmatpush1.msra.mxu0 %v477
    %555 = vmatprep.subr.mxu0 %v480
    %556 = vmatpush1.msra.mxu0 %v479
    %557 = vmatprep.subr.mxu0 %v482
    %558 = vmatpush1.msra.mxu0 %v481
    %559 = vmatprep.subr.mxu0 %v484
    %560 = vmatpush1.msra.mxu0 %v483
    %561 = vmatprep.subr.mxu0 %v486
    %562 = vmatpush1.msra.mxu0 %v485
    %563 = vmatprep.subr.mxu0 %v488
    %564 = vmatpush1.msra.mxu0 %v487
    %565 = vmatprep.subr.mxu0 %v490
    %566 = vmatpush1.msra.mxu0 %v489
    %567 = vmatprep.mubr.f32.mxu0 %v426
    %568 = vmatmul.mubr.f32.gmra.mrb[0].mxu0 %v425
    %v569 = vpop.f32.mrb[0].mxu0
    %v570 = vadd.f32 %v496, %v569
    %v571 = vpop.f32.mrb[0].mxu0
    %v572 = vadd.f32 %v500, %v571
    %573 = vdwg.mxu0
    %v574 = vxor.u32 %v570, 2147483648
    %v575 = vxor.u32 %v572, 2147483648
    %v576 = vmul.f32 %v574, 1.442695
    %v577 = vpow.pop %v576
    %v578 = vmul.f32 %v575, 1.442695
    %v579 = vpow.pop %v578
    %v580 = vadd.f32 %v577, 1.0
    %v581 = vadd.f32 %v579, 1.0
    %v582 = vrcp.pop %v580
    %v583 = vmul.f32 1.0, %v582
    %v584 = vrcp.pop %v581
    %v585 = vmul.f32 1.0, %v584
    %v586 = vmul.f32 %v570, %v583
    %v587 = vmul.f32 %v572, %v585
    %v588 = vld [vmem:[#allocation7] sm:$0xff]
    %v589 = vld [vmem:[#allocation7 + $0x8] sm:$0xff]
    %v590 = vld [vmem:[#allocation7 + $0x10] sm:$0xff]
    %v591 = vld [vmem:[#allocation7 + $0x18] sm:$0xff]
    %v592 = vld [vmem:[#allocation7 + $0x20] sm:$0xff]
    %v593 = vld [vmem:[#allocation7 + $0x28] sm:$0xff]
    %v594 = vld [vmem:[#allocation7 + $0x30] sm:$0xff]
    %v595 = vld [vmem:[#allocation7 + $0x38] sm:$0xff]
    %v596 = vld [vmem:[#allocation7 + $0x40] sm:$0xff]
    %v597 = vld [vmem:[#allocation7 + $0x48] sm:$0xff]
    %v598 = vld [vmem:[#allocation7 + $0x50] sm:$0xff]
    %v599 = vld [vmem:[#allocation7 + $0x58] sm:$0xff]
    %v600 = vld [vmem:[#allocation7 + $0x60] sm:$0xff]
    %v601 = vld [vmem:[#allocation7 + $0x68] sm:$0xff]
    %v602 = vld [vmem:[#allocation7 + $0x70] sm:$0xff]
    %v603 = vld [vmem:[#allocation7 + $0x78] sm:$0xff]
    %v604 = vld [vmem:[#allocation7 + $0x80] sm:$0xff]
    %v605 = vld [vmem:[#allocation7 + $0x88] sm:$0xff]
    %v606 = vld [vmem:[#allocation7 + $0x90] sm:$0xff]
    %v607 = vld [vmem:[#allocation7 + $0x98] sm:$0xff]
    %v608 = vld [vmem:[#allocation7 + $0xa0] sm:$0xff]
    %v609 = vld [vmem:[#allocation7 + $0xa8] sm:$0xff]
    %v610 = vld [vmem:[#allocation7 + $0xb0] sm:$0xff]
    %v611 = vld [vmem:[#allocation7 + $0xb8] sm:$0xff]
    %v612 = vld [vmem:[#allocation7 + $0xc0] sm:$0xff]
    %v613 = vld [vmem:[#allocation7 + $0xc8] sm:$0xff]
    %v614 = vld [vmem:[#allocation7 + $0xd0] sm:$0xff]
    %v615 = vld [vmem:[#allocation7 + $0xd8] sm:$0xff]
    %v616 = vld [vmem:[#allocation7 + $0xe0] sm:$0xff]
    %v617 = vld [vmem:[#allocation7 + $0xe8] sm:$0xff]
    %v618 = vld [vmem:[#allocation7 + $0xf0] sm:$0xff]
    %v619 = vld [vmem:[#allocation7 + $0xf8] sm:$0xff]
    %v620 = vld [vmem:[#allocation7 + $0x100] sm:$0xff]
    %v621 = vld [vmem:[#allocation7 + $0x108] sm:$0xff]
    %v622 = vld [vmem:[#allocation7 + $0x110] sm:$0xff]
    %v623 = vld [vmem:[#allocation7 + $0x118] sm:$0xff]
    %v624 = vld [vmem:[#allocation7 + $0x120] sm:$0xff]
    %v625 = vld [vmem:[#allocation7 + $0x128] sm:$0xff]
    %v626 = vld [vmem:[#allocation7 + $0x130] sm:$0xff]
    %v627 = vld [vmem:[#allocation7 + $0x138] sm:$0xff]
    %v628 = vld [vmem:[#allocation7 + $0x140] sm:$0xff]
    %v629 = vld [vmem:[#allocation7 + $0x148] sm:$0xff]
    %v630 = vld [vmem:[#allocation7 + $0x150] sm:$0xff]
    %v631 = vld [vmem:[#allocation7 + $0x158] sm:$0xff]
    %v632 = vld [vmem:[#allocation7 + $0x160] sm:$0xff]
    %v633 = vld [vmem:[#allocation7 + $0x168] sm:$0xff]
    %v634 = vld [vmem:[#allocation7 + $0x170] sm:$0xff]
    %v635 = vld [vmem:[#allocation7 + $0x178] sm:$0xff]
    %v636 = vld [vmem:[#allocation7 + $0x180] sm:$0xff]
    %v637 = vld [vmem:[#allocation7 + $0x188] sm:$0xff]
    %v638 = vld [vmem:[#allocation7 + $0x190] sm:$0xff]
    %v639 = vld [vmem:[#allocation7 + $0x198] sm:$0xff]
    %v640 = vld [vmem:[#allocation7 + $0x1a0] sm:$0xff]
    %v641 = vld [vmem:[#allocation7 + $0x1a8] sm:$0xff]
    %v642 = vld [vmem:[#allocation7 + $0x1b0] sm:$0xff]
    %v643 = vld [vmem:[#allocation7 + $0x1b8] sm:$0xff]
    %v644 = vld [vmem:[#allocation7 + $0x1c0] sm:$0xff]
    %v645 = vld [vmem:[#allocation7 + $0x1c8] sm:$0xff]
    %v646 = vld [vmem:[#allocation7 + $0x1d0] sm:$0xff]
    %v647 = vld [vmem:[#allocation7 + $0x1d8] sm:$0xff]
    %v648 = vld [vmem:[#allocation7 + $0x1e0] sm:$0xff]
    %v649 = vld [vmem:[#allocation7 + $0x1e8] sm:$0xff]
    %v650 = vld [vmem:[#allocation7 + $0x1f0] sm:$0xff]
    %v651 = vld [vmem:[#allocation7 + $0x1f8] sm:$0xff]
    %v652 = vld [vmem:[%s7] sm:$0x3]
    %v654 = vlaneseq
    %v655 = vshrl.u32 %v654, 7
    %v656 = vsub.s32 0, %v655
    %v657 = vrot.slane %v652, %v656
    %v658 = vlaneseq
    %v659 = vshrl.u32 %v658, 7
    %v660 = vsub.s32 1, %v659
    %v661 = vrot.slane %v652, %v660
    %664 = vmatprep.subr.mxu0 %v589
    %665 = vmatpush1.msra.mxu0 %v588
    %666 = vmatprep.subr.mxu0 %v591
    %667 = vmatpush1.msra.mxu0 %v590
    %668 = vmatprep.subr.mxu0 %v593
    %669 = vmatpush1.msra.mxu0 %v592
    %670 = vmatprep.subr.mxu0 %v595
    %671 = vmatpush1.msra.mxu0 %v594
    %672 = vmatprep.subr.mxu0 %v597
    %673 = vmatpush1.msra.mxu0 %v596
    %674 = vmatprep.subr.mxu0 %v599
    %675 = vmatpush1.msra.mxu0 %v598
    %676 = vmatprep.subr.mxu0 %v601
    %677 = vmatpush1.msra.mxu0 %v600
    %678 = vmatprep.subr.mxu0 %v603
    %679 = vmatpush1.msra.mxu0 %v602
    %680 = vmatprep.subr.mxu0 %v605
    %681 = vmatpush1.msra.mxu0 %v604
    %682 = vmatprep.subr.mxu0 %v607
    %683 = vmatpush1.msra.mxu0 %v606
    %684 = vmatprep.subr.mxu0 %v609
    %685 = vmatpush1.msra.mxu0 %v608
    %686 = vmatprep.subr.mxu0 %v611
    %687 = vmatpush1.msra.mxu0 %v610
    %688 = vmatprep.subr.mxu0 %v613
    %689 = vmatpush1.msra.mxu0 %v612
    %690 = vmatprep.subr.mxu0 %v615
    %691 = vmatpush1.msra.mxu0 %v614
    %692 = vmatprep.subr.mxu0 %v617
    %693 = vmatpush1.msra.mxu0 %v616
    %694 = vmatprep.subr.mxu0 %v619
    %695 = vmatpush1.msra.mxu0 %v618
    %696 = vmatprep.subr.mxu0 %v621
    %697 = vmatpush1.msra.mxu0 %v620
    %698 = vmatprep.subr.mxu0 %v623
    %699 = vmatpush1.msra.mxu0 %v622
    %700 = vmatprep.subr.mxu0 %v625
    %701 = vmatpush1.msra.mxu0 %v624
    %702 = vmatprep.subr.mxu0 %v627
    %703 = vmatpush1.msra.mxu0 %v626
    %704 = vmatprep.subr.mxu0 %v629
    %705 = vmatpush1.msra.mxu0 %v628
    %706 = vmatprep.subr.mxu0 %v631
    %707 = vmatpush1.msra.mxu0 %v630
    %708 = vmatprep.subr.mxu0 %v633
    %709 = vmatpush1.msra.mxu0 %v632
    %710 = vmatprep.subr.mxu0 %v635
    %711 = vmatpush1.msra.mxu0 %v634
    %712 = vmatprep.subr.mxu0 %v637
    %713 = vmatpush1.msra.mxu0 %v636
    %714 = vmatprep.subr.mxu0 %v639
    %715 = vmatpush1.msra.mxu0 %v638
    %716 = vmatprep.subr.mxu0 %v641
    %717 = vmatpush1.msra.mxu0 %v640
    %718 = vmatprep.subr.mxu0 %v643
    %719 = vmatpush1.msra.mxu0 %v642
    %720 = vmatprep.subr.mxu0 %v645
    %721 = vmatpush1.msra.mxu0 %v644
    %722 = vmatprep.subr.mxu0 %v647
    %723 = vmatpush1.msra.mxu0 %v646
    %724 = vmatprep.subr.mxu0 %v649
    %725 = vmatpush1.msra.mxu0 %v648
    %726 = vmatprep.subr.mxu0 %v651
    %727 = vmatpush1.msra.mxu0 %v650
    %728 = vmatprep.mubr.f32.mxu0 %v587
    %729 = vmatmul.mubr.f32.gmra.mrb[0].mxu0 %v586
    %v730 = vpop.f32.mrb[0].mxu0
    %v731 = vadd.f32 %v657, %v730
    %v732 = vpop.f32.mrb[0].mxu0
    %v733 = vadd.f32 %v661, %v732
    %734 = vdwg.mxu0
    %v737 = vcombine.low %v731, %v733
    %v739 = vunpack.c.l.s4 1983009808
    %v740 = vunpack.c.0.s8 %v739
    %v741 = vlaneseq
    %v742 = vshrl.u32 %v741, 7
    %v743 = vsub.s32 %v740, %v742
    %v744 = vrot.slane %v737, %v743
    %746 = vst [vmem:[#allocation8] sm:$0xf] %v744
    // Predicated region
    $region46: #{tpu_custom_call.1} parent=1 // pred_check
      _
    $region47: #{tpu_custom_call.1} parent=1 // pred_check_branch
      %748 = sbr.rel (0) target = $region49
    $region48: #{tpu_custom_call.1} parent=1 // pred_region
      %s750 = ssub.s32 64, 64
      %751 = vsyncadd [#allocation4], %s750
      %s753 = sshll.u32 [#allocation8], 4
      %s754 = int_to_ptr.vmem [resolvable:$true] %s753
      %756 = dma.vmem_to_hbm [thread:$0]  %s754, 64, %s8, [#allocation4]
    $region49: #{tpu_custom_call.1} parent=1 // pred_fallthru
      _
    // Predicated region
    $region50: #{tpu_custom_call.1} parent=1 // pred_check
      _
    $region51: #{tpu_custom_call.1} parent=1 // pred_check_branch
      %758 = sbr.rel (0) target = $region53
    $region52: #{tpu_custom_call.1} parent=1 // pred_region
      %759 = dma.done [#allocation4], 64
    $region53: #{tpu_custom_call.1} parent=1 // pred_fallthru
      _
    %760 = vsyncpa [#allocation3], 1
    %761 = vsyncpa [#allocation6], 1
    %762 = vsyncpa [#allocation4], 1

</llo_original>
